<compile_context>
chip_gen: v7x
topology: tpu7x:2x2x1
jax: 0.10.0
libtpu: 0.0.40
codegen_flags: <defaults>
</compile_context>

<pallas_src>
import functools

import jax
import jax.numpy as jnp
from jax.experimental import pallas as pl
from jax.experimental.pallas import tpu as pltpu


# ----------------------------------------------------------------------------
# Fused Pallas kernels
# ----------------------------------------------------------------------------
def _fused_m2_kernel(*refs, n_enc_hidden, n_dec_hidden, latent_dim):
    """Entire M2/VAE forward for one batch tile.  All weights resident in VMEM.

    refs layout (inputs, then outputs):
      x, y, eps,
      enc_Wx0, enc_Wy0, enc_b0,                 # first encoder layer, W split for in-reg concat
      [enc_Wi, enc_bi] * (n_enc_hidden - 1),
      head_W, head_b,                           # fused [mu | logvar] head
      dec_Wz0, dec_Wy0, dec_b0,                 # first decoder layer, W split for in-reg concat
      [dec_Wi, dec_bi] * (n_dec_hidden - 1),
      out_W, out_b,
      out_ref, mu_ref, logvar_ref
    """
    it = iter(refs)
    x_ref, y_ref, eps_ref = next(it), next(it), next(it)
    enc_wx, enc_wy, enc_b0 = next(it), next(it), next(it)
    enc_rest = [(next(it), next(it)) for _ in range(n_enc_hidden - 1)]
    head_w, head_b = next(it), next(it)
    dec_wz, dec_wy, dec_b0 = next(it), next(it), next(it)
    dec_rest = [(next(it), next(it)) for _ in range(n_dec_hidden - 1)]
    out_w, out_b = next(it), next(it)
    out_ref, mu_ref, lv_ref = next(it), next(it), next(it)

    x = x_ref[...]
    y = y_ref[...]
    eps = eps_ref[...]

    # --- encoder: cat(x, y) handled as x @ Wx + y @ Wy (no HBM concat) ------
    h = jnp.dot(x, enc_wx[...], preferred_element_type=jnp.float32)
    h = h + jnp.dot(y, enc_wy[...], preferred_element_type=jnp.float32)
    h = jnp.maximum(h + enc_b0[...], 0.0)
    for w_r, b_r in enc_rest:
        h = jnp.dot(h, w_r[...], preferred_element_type=jnp.float32) + b_r[...]
        h = jnp.maximum(h, 0.0)

    # --- fused mu / logvar head: one (hidden, 2*latent) matmul ---------------
    ml = jnp.dot(h, head_w[...], preferred_element_type=jnp.float32) + head_b[...]
    mu = ml[:, :latent_dim]
    logvar = ml[:, latent_dim:]

    # --- reparameterization, in-register -------------------------------------
    z = mu + eps * jnp.exp(0.5 * logvar)

    # --- decoder: cat(z, y) handled as z @ Wz + y @ Wy ------------------------
    d = jnp.dot(z, dec_wz[...], preferred_element_type=jnp.float32)
    d = d + jnp.dot(y, dec_wy[...], preferred_element_type=jnp.float32)
    d = jnp.maximum(d + dec_b0[...], 0.0)
    for w_r, b_r in dec_rest:
        d = jnp.dot(d, w_r[...], preferred_element_type=jnp.float32) + b_r[...]
        d = jnp.maximum(d, 0.0)

    o = jnp.dot(d, out_w[...], preferred_element_type=jnp.float32) + out_b[...]
    o = 1.0 / (1.0 + jnp.exp(-o))          # sigmoid; exp goes to the EUP slot

    out_ref[...] = o.astype(out_ref.dtype)
    mu_ref[...] = mu.astype(mu_ref.dtype)
    lv_ref[...] = logvar.astype(lv_ref.dtype)


def _fused_mlp_kernel(*refs, n_hidden, softmax):
    """Generic fused ReLU-MLP (used for the M2.classify path)."""
    it = iter(refs)
    x_ref = next(it)
    layers = [(next(it), next(it)) for _ in range(n_hidden)]
    out_w, out_b = next(it), next(it)
    o_ref = next(it)

    h = x_ref[...]
    for w_r, b_r in layers:
        h = jnp.dot(h, w_r[...], preferred_element_type=jnp.float32) + b_r[...]
        h = jnp.maximum(h, 0.0)
    logits = jnp.dot(h, out_w[...], preferred_element_type=jnp.float32) + out_b[...]
    if softmax:
        m = jnp.max(logits, axis=-1, keepdims=True)
        e = jnp.exp(logits - m)
        logits = e * pl.reciprocal(jnp.sum(e, axis=-1, keepdims=True), approx=False)
    o_ref[...] = logits.astype(o_ref.dtype)


# ----------------------------------------------------------------------------
# pallas_call plumbing (batch-parallel grid, whole weights resident in VMEM)
# ----------------------------------------------------------------------------
def _pick_batch_tile(B):
    if B <= 512:
        return B
    for t in (512, 256, 128, 64, 32, 16, 8):
        if B % t == 0:
            return t
    return B


def _batched_pallas_call(kernel, data_args, weight_args, out_shapes):
    """Grid over batch rows only; weights use a constant index_map (stay resident)."""
    B = data_args[0].shape[0]
    b_tile = _pick_batch_tile(B)
    grid = (B // b_tile,)

    in_specs = (
        [pl.BlockSpec((b_tile, a.shape[1]), lambda i: (i, 0)) for a in data_args]
        + [pl.BlockSpec(w.shape, lambda i: (0, 0)) for w in weight_args]
    )
    out_specs = [pl.BlockSpec((b_tile, s.shape[1]), lambda i: (i, 0)) for s in out_shapes]

    multi = len(out_shapes) > 1
    return pl.pallas_call(
        kernel,
        out_shape=tuple(out_shapes) if multi else out_shapes[0],
        grid=grid,
        in_specs=in_specs,
        out_specs=tuple(out_specs) if multi else out_specs[0],
        compiler_params=pltpu.CompilerParams(
            dimension_semantics=("parallel",)),   # v7x: 2nd TC used for big batches
    )(*data_args, *weight_args)


# ----------------------------------------------------------------------------
# Parameter construction (deterministic, in-script) + fusion prep
# ----------------------------------------------------------------------------
def _init_linear(key, din, dout, dtype=jnp.float32):
    kw, kb = jax.random.split(key)
    bound = 1.0 / jnp.sqrt(din)
    w = jax.random.uniform(kw, (din, dout), dtype, -bound, bound)
    b = jax.random.uniform(kb, (dout,), dtype, -bound, bound)
    return w, b


def init_m2_params(key, input_size, hidden_vae, hidden_clas, latent_dim,
                   num_classes):
    params = {}
    keys = jax.random.split(key, 16)
    ki = iter(keys)

    enc_dims = [input_size + num_classes] + list(hidden_vae)
    params["enc_layers"] = [
        _init_linear(next(ki), enc_dims[i], enc_dims[i + 1])
        for i in range(len(enc_dims) - 1)
    ]
    params["enc_mu"] = _init_linear(next(ki), enc_dims[-1], latent_dim)
    params["enc_logvar"] = _init_linear(next(ki), enc_dims[-1], latent_dim)

    dec_dims = [latent_dim + num_classes] + list(hidden_vae)
    params["dec_layers"] = [
        _init_linear(next(ki), dec_dims[i], dec_dims[i + 1])
        for i in range(len(dec_dims) - 1)
    ]
    params["dec_out"] = _init_linear(next(ki), dec_dims[-1], input_size)

    clas_dims = [input_size] + list(hidden_clas)
    params["clas_layers"] = [
        _init_linear(next(ki), clas_dims[i], clas_dims[i + 1])
        for i in range(len(clas_dims) - 1)
    ]
    params["clas_out"] = _init_linear(next(ki), clas_dims[-1], num_classes)
    return params


def fuse_m2_params(params, input_size, latent_dim):
    """Flatten + pre-transform params for the fused kernel (done ONCE, off hot path)."""
    flat = []
    # encoder first layer: split W rows into (x-part, y-part) for in-kernel concat
    w0, b0 = params["enc_layers"][0]
    flat += [w0[:input_size, :], w0[input_size:, :], b0.reshape(1, -1)]
    for w, b in params["enc_layers"][1:]:
        flat += [w, b.reshape(1, -1)]
    # fused [mu | logvar] head
    w_mu, b_mu = params["enc_mu"]
    w_lv, b_lv = params["enc_logvar"]
    flat += [jnp.concatenate([w_mu, w_lv], axis=1),
             jnp.concatenate([b_mu, b_lv]).reshape(1, -1)]
    # decoder first layer: split W rows into (z-part, y-part)
    wd0, bd0 = params["dec_layers"][0]
    flat += [wd0[:latent_dim, :], wd0[latent_dim:, :], bd0.reshape(1, -1)]
    for w, b in params["dec_layers"][1:]:
        flat += [w, b.reshape(1, -1)]
    wo, bo = params["dec_out"]
    flat += [wo, bo.reshape(1, -1)]
    return tuple(flat)


def fuse_classifier_params(params):
    flat = []
    for w, b in params["clas_layers"]:
        flat += [w, b.reshape(1, -1)]
    wo, bo = params["clas_out"]
    flat += [wo, bo.reshape(1, -1)]
    return tuple(flat)


# ----------------------------------------------------------------------------
# M2 forward (== VAE_M2.forward) and classify — one pallas_call each
# ----------------------------------------------------------------------------
def m2_forward(fused_params, x, y, eps, *, n_enc_hidden, n_dec_hidden,
               latent_dim, input_size):
    B = x.shape[0]
    kernel = functools.partial(_fused_m2_kernel,
                               n_enc_hidden=n_enc_hidden,
                               n_dec_hidden=n_dec_hidden,
                               latent_dim=latent_dim)
    out_shapes = [
        jax.ShapeDtypeStruct((B, input_size), x.dtype),   # decoder output
        jax.ShapeDtypeStruct((B, latent_dim), x.dtype),   # mu
        jax.ShapeDtypeStruct((B, latent_dim), x.dtype),   # logvar
    ]
    return _batched_pallas_call(kernel, [x, y, eps], list(fused_params), out_shapes)


def m2_classify(fused_clas_params, x, *, n_hidden, num_classes):
    B = x.shape[0]
    kernel = functools.partial(_fused_mlp_kernel, n_hidden=n_hidden, softmax=True)
    out_shapes = [jax.ShapeDtypeStruct((B, num_classes), x.dtype)]
    return _batched_pallas_call(kernel, [x], [*fused_clas_params], out_shapes)


# ----------------------------------------------------------------------------
if __name__ == "__main__":
    # small, deterministic configuration
    batch = 8
    input_size = 32
    hidden_vae = (64, 64)
    hidden_clas = (48,)
    latent_dim = 16
    num_classes = 4

    root = jax.random.PRNGKey(0)
    kp, kx, ky, ke = jax.random.split(root, 4)

    params = init_m2_params(kp, input_size, hidden_vae, hidden_clas,
                            latent_dim, num_classes)
    fused = fuse_m2_params(params, input_size, latent_dim)
    fused_clas = fuse_classifier_params(params)

    x = jax.random.uniform(kx, (batch, input_size), jnp.float32)      # data
    labels = jax.random.randint(ky, (batch,), 0, num_classes)
    y = jax.nn.one_hot(labels, num_classes, dtype=jnp.float32)        # one-hot labels
    # TODO(synk): torch samples eps inside the encoder (randn_like); passed
    # explicitly here so the kernel is deterministic and testable.
    eps = jax.random.normal(ke, (batch, latent_dim), jnp.float32)

    fwd = jax.jit(functools.partial(
        m2_forward,
        n_enc_hidden=len(hidden_vae), n_dec_hidden=len(hidden_vae),
        latent_dim=latent_dim, input_size=input_size))
    out, mu, logvar = fwd(fused, x, y, eps)
    jax.block_until_ready((out, mu, logvar))

    # sanity: reference in plain JAX (original un-fused parameter layout)
    def ref_forward(params, x, y, eps):
        h = jnp.concatenate([x, y], axis=1)
        for w, b in params["enc_layers"]:
            h = jnp.maximum(h @ w + b, 0.0)
        mu_r = h @ params["enc_mu"][0] + params["enc_mu"][1]
        lv_r = h @ params["enc_logvar"][0] + params["enc_logvar"][1]
        z = mu_r + eps * jnp.exp(0.5 * lv_r)
        d = jnp.concatenate([z, y], axis=1)
        for w, b in params["dec_layers"]:
            d = jnp.maximum(d @ w + b, 0.0)
        logits = d @ params["dec_out"][0] + params["dec_out"][1]
        o = 1.0 / (1.0 + jnp.exp(-logits))
        return o, mu_r, lv_r

    out_r, mu_r, lv_r = ref_forward(params, x, y, eps)
    assert jnp.allclose(out, out_r, atol=1e-5), "decoder output mismatch"
    assert jnp.allclose(mu, mu_r, atol=1e-5), "mu mismatch"
    assert jnp.allclose(logvar, lv_r, atol=1e-5), "logvar mismatch"

    # classifier path (M2.classify; not used by forward, provided for API completeness)
    clf = jax.jit(functools.partial(m2_classify,
                                    n_hidden=len(hidden_clas),
                                    num_classes=num_classes))
    probs = clf(fused_clas, x)
    jax.block_until_ready(probs)

    def ref_classify(params, x):
        h = x
        for w, b in params["clas_layers"]:
            h = jnp.maximum(h @ w + b, 0.0)
        return jax.nn.softmax(h @ params["clas_out"][0] + params["clas_out"][1], axis=-1)

    assert jnp.allclose(probs, ref_classify(params, x), atol=1e-5), "classifier mismatch"

    print("KERNEL_OK")
</pallas_src>

<mosaic_0001>
module attributes {stable_mosaic.version = 11 : i64} {
  func.func @_fused_m2_kernel(%arg0: i32, %arg1: memref<8x32xf32, #tpu.memory_space<vmem>>, %arg2: memref<8x4xf32, #tpu.memory_space<vmem>>, %arg3: memref<8x16xf32, #tpu.memory_space<vmem>>, %arg4: memref<32x64xf32, #tpu.memory_space<vmem>>, %arg5: memref<4x64xf32, #tpu.memory_space<vmem>>, %arg6: memref<1x64xf32, #tpu.memory_space<vmem>>, %arg7: memref<64x64xf32, #tpu.memory_space<vmem>>, %arg8: memref<1x64xf32, #tpu.memory_space<vmem>>, %arg9: memref<64x32xf32, #tpu.memory_space<vmem>>, %arg10: memref<1x32xf32, #tpu.memory_space<vmem>>, %arg11: memref<16x64xf32, #tpu.memory_space<vmem>>, %arg12: memref<4x64xf32, #tpu.memory_space<vmem>>, %arg13: memref<1x64xf32, #tpu.memory_space<vmem>>, %arg14: memref<64x64xf32, #tpu.memory_space<vmem>>, %arg15: memref<1x64xf32, #tpu.memory_space<vmem>>, %arg16: memref<64x32xf32, #tpu.memory_space<vmem>>, %arg17: memref<1x32xf32, #tpu.memory_space<vmem>>, %arg18: memref<8x32xf32, #tpu.memory_space<vmem>>, %arg19: memref<8x16xf32, #tpu.memory_space<vmem>>, %arg20: memref<8x16xf32, #tpu.memory_space<vmem>>) attributes {dimension_semantics = [#tpu.dimension_semantics<parallel>], iteration_bounds = array<i64: 1>, scalar_prefetch = 0 : i64, scratch_operands = 0 : i64, tpu.core_type = #tpu.core_type<tc>, window_params = [{transform_indices = @transform_0, window_bounds = array<i64: 8, 32>}, {transform_indices = @transform_1, window_bounds = array<i64: 8, 4>}, {transform_indices = @transform_2, window_bounds = array<i64: 8, 16>}, {pipeline_mode = #tpu.pipeline_mode<synchronous>, transform_indices = @transform_3, window_bounds = array<i64: 32, 64>}, {pipeline_mode = #tpu.pipeline_mode<synchronous>, transform_indices = @transform_4, window_bounds = array<i64: 4, 64>}, {pipeline_mode = #tpu.pipeline_mode<synchronous>, transform_indices = @transform_5, window_bounds = array<i64: 1, 64>}, {pipeline_mode = #tpu.pipeline_mode<synchronous>, transform_indices = @transform_6, window_bounds = array<i64: 64, 64>}, {pipeline_mode = #tpu.pipeline_mode<synchronous>, transform_indices = @transform_7, window_bounds = array<i64: 1, 64>}, {pipeline_mode = #tpu.pipeline_mode<synchronous>, transform_indices = @transform_8, window_bounds = array<i64: 64, 32>}, {pipeline_mode = #tpu.pipeline_mode<synchronous>, transform_indices = @transform_9, window_bounds = array<i64: 1, 32>}, {pipeline_mode = #tpu.pipeline_mode<synchronous>, transform_indices = @transform_10, window_bounds = array<i64: 16, 64>}, {pipeline_mode = #tpu.pipeline_mode<synchronous>, transform_indices = @transform_11, window_bounds = array<i64: 4, 64>}, {pipeline_mode = #tpu.pipeline_mode<synchronous>, transform_indices = @transform_12, window_bounds = array<i64: 1, 64>}, {pipeline_mode = #tpu.pipeline_mode<synchronous>, transform_indices = @transform_13, window_bounds = array<i64: 64, 64>}, {pipeline_mode = #tpu.pipeline_mode<synchronous>, transform_indices = @transform_14, window_bounds = array<i64: 1, 64>}, {pipeline_mode = #tpu.pipeline_mode<synchronous>, transform_indices = @transform_15, window_bounds = array<i64: 64, 32>}, {pipeline_mode = #tpu.pipeline_mode<synchronous>, transform_indices = @transform_16, window_bounds = array<i64: 1, 32>}, {transform_indices = @transform_17, window_bounds = array<i64: 8, 32>}, {transform_indices = @transform_18, window_bounds = array<i64: 8, 16>}, {transform_indices = @transform_19, window_bounds = array<i64: 8, 16>}]} {
    %c0 = arith.constant 0 : index
    %c0_0 = arith.constant 0 : index
    %0 = vector.load %arg1[%c0, %c0_0] : memref<8x32xf32, #tpu.memory_space<vmem>>, vector<8x32xf32>
    %c0_1 = arith.constant 0 : index
    %c0_2 = arith.constant 0 : index
    %1 = vector.load %arg2[%c0_1, %c0_2] : memref<8x4xf32, #tpu.memory_space<vmem>>, vector<8x4xf32>
    %c0_3 = arith.constant 0 : index
    %c0_4 = arith.constant 0 : index
    %2 = vector.load %arg3[%c0_3, %c0_4] : memref<8x16xf32, #tpu.memory_space<vmem>>, vector<8x16xf32>
    %c0_5 = arith.constant 0 : index
    %c0_6 = arith.constant 0 : index
    %3 = vector.load %arg4[%c0_5, %c0_6] : memref<32x64xf32, #tpu.memory_space<vmem>>, vector<32x64xf32>
    %cst = arith.constant dense<0.000000e+00> : vector<8x64xf32>
    %4 = tpu.matmul %0, %3, %cst {dimension_numbers = #tpu.dot_dimension_numbers<[1], [0], [0], [1], [0, 0, 1, 1], [], []>} : vector<8x32xf32>, vector<32x64xf32>, vector<8x64xf32> -> vector<8x64xf32>
    %c0_7 = arith.constant 0 : index
    %c0_8 = arith.constant 0 : index
    %5 = vector.load %arg5[%c0_7, %c0_8] : memref<4x64xf32, #tpu.memory_space<vmem>>, vector<4x64xf32>
    %cst_9 = arith.constant dense<0.000000e+00> : vector<8x64xf32>
    %6 = tpu.matmul %1, %5, %cst_9 {dimension_numbers = #tpu.dot_dimension_numbers<[1], [0], [0], [1], [0, 0, 1, 1], [], []>} : vector<8x4xf32>, vector<4x64xf32>, vector<8x64xf32> -> vector<8x64xf32>
    %7 = arith.addf %4, %6 : vector<8x64xf32>
    %c0_10 = arith.constant 0 : index
    %c0_11 = arith.constant 0 : index
    %8 = vector.load %arg6[%c0_10, %c0_11] : memref<1x64xf32, #tpu.memory_space<vmem>>, vector<1x64xf32>
    %9 = vector.broadcast %8 : vector<1x64xf32> to vector<8x64xf32>
    %10 = arith.addf %7, %9 : vector<8x64xf32>
    %cst_12 = arith.constant 0.000000e+00 : f32
    %11 = vector.broadcast %cst_12 : f32 to vector<8x64xf32>
    %12 = arith.maximumf %10, %11 : vector<8x64xf32>
    %c0_13 = arith.constant 0 : index
    %c0_14 = arith.constant 0 : index
    %13 = vector.load %arg7[%c0_13, %c0_14] : memref<64x64xf32, #tpu.memory_space<vmem>>, vector<64x64xf32>
    %cst_15 = arith.constant dense<0.000000e+00> : vector<8x64xf32>
    %14 = tpu.matmul %12, %13, %cst_15 {dimension_numbers = #tpu.dot_dimension_numbers<[1], [0], [0], [1], [0, 0, 1, 1], [], []>} : vector<8x64xf32>, vector<64x64xf32>, vector<8x64xf32> -> vector<8x64xf32>
    %c0_16 = arith.constant 0 : index
    %c0_17 = arith.constant 0 : index
    %15 = vector.load %arg8[%c0_16, %c0_17] : memref<1x64xf32, #tpu.memory_space<vmem>>, vector<1x64xf32>
    %16 = vector.broadcast %15 : vector<1x64xf32> to vector<8x64xf32>
    %17 = arith.addf %14, %16 : vector<8x64xf32>
    %cst_18 = arith.constant 0.000000e+00 : f32
    %18 = vector.broadcast %cst_18 : f32 to vector<8x64xf32>
    %19 = arith.maximumf %17, %18 : vector<8x64xf32>
    %c0_19 = arith.constant 0 : index
    %c0_20 = arith.constant 0 : index
    %20 = vector.load %arg9[%c0_19, %c0_20] : memref<64x32xf32, #tpu.memory_space<vmem>>, vector<64x32xf32>
    %cst_21 = arith.constant dense<0.000000e+00> : vector<8x32xf32>
    %21 = tpu.matmul %19, %20, %cst_21 {dimension_numbers = #tpu.dot_dimension_numbers<[1], [0], [0], [1], [0, 0, 1, 1], [], []>} : vector<8x64xf32>, vector<64x32xf32>, vector<8x32xf32> -> vector<8x32xf32>
    %c0_22 = arith.constant 0 : index
    %c0_23 = arith.constant 0 : index
    %22 = vector.load %arg10[%c0_22, %c0_23] : memref<1x32xf32, #tpu.memory_space<vmem>>, vector<1x32xf32>
    %23 = vector.broadcast %22 : vector<1x32xf32> to vector<8x32xf32>
    %24 = arith.addf %21, %23 : vector<8x32xf32>
    %25 = vector.extract_strided_slice %24 {offsets = [0, 0], sizes = [8, 16], strides = [1, 1]} : vector<8x32xf32> to vector<8x16xf32>
    %26 = vector.extract_strided_slice %24 {offsets = [0, 16], sizes = [8, 16], strides = [1, 1]} : vector<8x32xf32> to vector<8x16xf32>
    %cst_24 = arith.constant 5.000000e-01 : f32
    %27 = vector.broadcast %cst_24 : f32 to vector<8x16xf32>
    %28 = arith.mulf %27, %26 : vector<8x16xf32>
    %29 = math.exp %28 : vector<8x16xf32>
    %30 = arith.mulf %2, %29 : vector<8x16xf32>
    %31 = arith.addf %25, %30 : vector<8x16xf32>
    %c0_25 = arith.constant 0 : index
    %c0_26 = arith.constant 0 : index
    %32 = vector.load %arg11[%c0_25, %c0_26] : memref<16x64xf32, #tpu.memory_space<vmem>>, vector<16x64xf32>
    %cst_27 = arith.constant dense<0.000000e+00> : vector<8x64xf32>
    %33 = tpu.matmul %31, %32, %cst_27 {dimension_numbers = #tpu.dot_dimension_numbers<[1], [0], [0], [1], [0, 0, 1, 1], [], []>} : vector<8x16xf32>, vector<16x64xf32>, vector<8x64xf32> -> vector<8x64xf32>
    %c0_28 = arith.constant 0 : index
    %c0_29 = arith.constant 0 : index
    %34 = vector.load %arg12[%c0_28, %c0_29] : memref<4x64xf32, #tpu.memory_space<vmem>>, vector<4x64xf32>
    %cst_30 = arith.constant dense<0.000000e+00> : vector<8x64xf32>
    %35 = tpu.matmul %1, %34, %cst_30 {dimension_numbers = #tpu.dot_dimension_numbers<[1], [0], [0], [1], [0, 0, 1, 1], [], []>} : vector<8x4xf32>, vector<4x64xf32>, vector<8x64xf32> -> vector<8x64xf32>
    %36 = arith.addf %33, %35 : vector<8x64xf32>
    %c0_31 = arith.constant 0 : index
    %c0_32 = arith.constant 0 : index
    %37 = vector.load %arg13[%c0_31, %c0_32] : memref<1x64xf32, #tpu.memory_space<vmem>>, vector<1x64xf32>
    %38 = vector.broadcast %37 : vector<1x64xf32> to vector<8x64xf32>
    %39 = arith.addf %36, %38 : vector<8x64xf32>
    %cst_33 = arith.constant 0.000000e+00 : f32
    %40 = vector.broadcast %cst_33 : f32 to vector<8x64xf32>
    %41 = arith.maximumf %39, %40 : vector<8x64xf32>
    %c0_34 = arith.constant 0 : index
    %c0_35 = arith.constant 0 : index
    %42 = vector.load %arg14[%c0_34, %c0_35] : memref<64x64xf32, #tpu.memory_space<vmem>>, vector<64x64xf32>
    %cst_36 = arith.constant dense<0.000000e+00> : vector<8x64xf32>
    %43 = tpu.matmul %41, %42, %cst_36 {dimension_numbers = #tpu.dot_dimension_numbers<[1], [0], [0], [1], [0, 0, 1, 1], [], []>} : vector<8x64xf32>, vector<64x64xf32>, vector<8x64xf32> -> vector<8x64xf32>
    %c0_37 = arith.constant 0 : index
    %c0_38 = arith.constant 0 : index
    %44 = vector.load %arg15[%c0_37, %c0_38] : memref<1x64xf32, #tpu.memory_space<vmem>>, vector<1x64xf32>
    %45 = vector.broadcast %44 : vector<1x64xf32> to vector<8x64xf32>
    %46 = arith.addf %43, %45 : vector<8x64xf32>
    %cst_39 = arith.constant 0.000000e+00 : f32
    %47 = vector.broadcast %cst_39 : f32 to vector<8x64xf32>
    %48 = arith.maximumf %46, %47 : vector<8x64xf32>
    %c0_40 = arith.constant 0 : index
    %c0_41 = arith.constant 0 : index
    %49 = vector.load %arg16[%c0_40, %c0_41] : memref<64x32xf32, #tpu.memory_space<vmem>>, vector<64x32xf32>
    %cst_42 = arith.constant dense<0.000000e+00> : vector<8x32xf32>
    %50 = tpu.matmul %48, %49, %cst_42 {dimension_numbers = #tpu.dot_dimension_numbers<[1], [0], [0], [1], [0, 0, 1, 1], [], []>} : vector<8x64xf32>, vector<64x32xf32>, vector<8x32xf32> -> vector<8x32xf32>
    %c0_43 = arith.constant 0 : index
    %c0_44 = arith.constant 0 : index
    %51 = vector.load %arg17[%c0_43, %c0_44] : memref<1x32xf32, #tpu.memory_space<vmem>>, vector<1x32xf32>
    %52 = vector.broadcast %51 : vector<1x32xf32> to vector<8x32xf32>
    %53 = arith.addf %50, %52 : vector<8x32xf32>
    %cst_45 = arith.constant 0.000000e+00 : f32
    %54 = vector.broadcast %cst_45 : f32 to vector<8x32xf32>
    %55 = arith.subf %54, %53 : vector<8x32xf32>
    %56 = math.exp %55 : vector<8x32xf32>
    %cst_46 = arith.constant 1.000000e+00 : f32
    %57 = vector.broadcast %cst_46 : f32 to vector<8x32xf32>
    %58 = arith.addf %57, %56 : vector<8x32xf32>
    %cst_47 = arith.constant 1.000000e+00 : f32
    %59 = vector.broadcast %cst_47 : f32 to vector<8x32xf32>
    %60 = arith.divf %59, %58 : vector<8x32xf32>
    %c0_48 = arith.constant 0 : index
    %c0_49 = arith.constant 0 : index
    %61 = vector.load %arg18[%c0_48, %c0_49] : memref<8x32xf32, #tpu.memory_space<vmem>>, vector<8x32xf32>
    tpu.vector_store %arg18[%c0_48, %c0_49], %60 {strides = array<i32>} : memref<8x32xf32, #tpu.memory_space<vmem>>, vector<8x32xf32>,
    %c0_50 = arith.constant 0 : index
    %c0_51 = arith.constant 0 : index
    %62 = vector.load %arg19[%c0_50, %c0_51] : memref<8x16xf32, #tpu.memory_space<vmem>>, vector<8x16xf32>
    tpu.vector_store %arg19[%c0_50, %c0_51], %25 {strides = array<i32>} : memref<8x16xf32, #tpu.memory_space<vmem>>, vector<8x16xf32>,
    %c0_52 = arith.constant 0 : index
    %c0_53 = arith.constant 0 : index
    %63 = vector.load %arg20[%c0_52, %c0_53] : memref<8x16xf32, #tpu.memory_space<vmem>>, vector<8x16xf32>
    tpu.vector_store %arg20[%c0_52, %c0_53], %26 {strides = array<i32>} : memref<8x16xf32, #tpu.memory_space<vmem>>, vector<8x16xf32>,
    return
  }
  func.func @transform_0(%arg0: i32) -> (i32, i32) {
    %c0_i32 = arith.constant 0 : i32
    %c0_i32_0 = arith.constant 0 : i32
    return %arg0, %c0_i32 : i32, i32
  }
  func.func @transform_1(%arg0: i32) -> (i32, i32) {
    %c0_i32 = arith.constant 0 : i32
    %c0_i32_0 = arith.constant 0 : i32
    return %arg0, %c0_i32 : i32, i32
  }
  func.func @transform_2(%arg0: i32) -> (i32, i32) {
    %c0_i32 = arith.constant 0 : i32
    %c0_i32_0 = arith.constant 0 : i32
    return %arg0, %c0_i32 : i32, i32
  }
  func.func @transform_3(%arg0: i32) -> (i32, i32) {
    %c0_i32 = arith.constant 0 : i32
    %c0_i32_0 = arith.constant 0 : i32
    %c0_i32_1 = arith.constant 0 : i32
    return %c0_i32, %c0_i32_0 : i32, i32
  }
  func.func @transform_4(%arg0: i32) -> (i32, i32) {
    %c0_i32 = arith.constant 0 : i32
    %c0_i32_0 = arith.constant 0 : i32
    %c0_i32_1 = arith.constant 0 : i32
    return %c0_i32, %c0_i32_0 : i32, i32
  }
  func.func @transform_5(%arg0: i32) -> (i32, i32) {
    %c0_i32 = arith.constant 0 : i32
    %c0_i32_0 = arith.constant 0 : i32
    %c0_i32_1 = arith.constant 0 : i32
    return %c0_i32, %c0_i32_0 : i32, i32
  }
  func.func @transform_6(%arg0: i32) -> (i32, i32) {
    %c0_i32 = arith.constant 0 : i32
    %c0_i32_0 = arith.constant 0 : i32
    %c0_i32_1 = arith.constant 0 : i32
    return %c0_i32, %c0_i32_0 : i32, i32
  }
  func.func @transform_7(%arg0: i32) -> (i32, i32) {
    %c0_i32 = arith.constant 0 : i32
    %c0_i32_0 = arith.constant 0 : i32
    %c0_i32_1 = arith.constant 0 : i32
    return %c0_i32, %c0_i32_0 : i32, i32
  }
  func.func @transform_8(%arg0: i32) -> (i32, i32) {
    %c0_i32 = arith.constant 0 : i32
    %c0_i32_0 = arith.constant 0 : i32
    %c0_i32_1 = arith.constant 0 : i32
    return %c0_i32, %c0_i32_0 : i32, i32
  }
  func.func @transform_9(%arg0: i32) -> (i32, i32) {
    %c0_i32 = arith.constant 0 : i32
    %c0_i32_0 = arith.constant 0 : i32
    %c0_i32_1 = arith.constant 0 : i32
    return %c0_i32, %c0_i32_0 : i32, i32
  }
  func.func @transform_10(%arg0: i32) -> (i32, i32) {
    %c0_i32 = arith.constant 0 : i32
    %c0_i32_0 = arith.constant 0 : i32
    %c0_i32_1 = arith.constant 0 : i32
    return %c0_i32, %c0_i32_0 : i32, i32
  }
  func.func @transform_11(%arg0: i32) -> (i32, i32) {
    %c0_i32 = arith.constant 0 : i32
    %c0_i32_0 = arith.constant 0 : i32
    %c0_i32_1 = arith.constant 0 : i32
    return %c0_i32, %c0_i32_0 : i32, i32
  }
  func.func @transform_12(%arg0: i32) -> (i32, i32) {
    %c0_i32 = arith.constant 0 : i32
    %c0_i32_0 = arith.constant 0 : i32
    %c0_i32_1 = arith.constant 0 : i32
    return %c0_i32, %c0_i32_0 : i32, i32
  }
  func.func @transform_13(%arg0: i32) -> (i32, i32) {
    %c0_i32 = arith.constant 0 : i32
    %c0_i32_0 = arith.constant 0 : i32
    %c0_i32_1 = arith.constant 0 : i32
    return %c0_i32, %c0_i32_0 : i32, i32
  }
  func.func @transform_14(%arg0: i32) -> (i32, i32) {
    %c0_i32 = arith.constant 0 : i32
    %c0_i32_0 = arith.constant 0 : i32
    %c0_i32_1 = arith.constant 0 : i32
    return %c0_i32, %c0_i32_0 : i32, i32
  }
  func.func @transform_15(%arg0: i32) -> (i32, i32) {
    %c0_i32 = arith.constant 0 : i32
    %c0_i32_0 = arith.constant 0 : i32
    %c0_i32_1 = arith.constant 0 : i32
    return %c0_i32, %c0_i32_0 : i32, i32
  }
  func.func @transform_16(%arg0: i32) -> (i32, i32) {
    %c0_i32 = arith.constant 0 : i32
    %c0_i32_0 = arith.constant 0 : i32
    %c0_i32_1 = arith.constant 0 : i32
    return %c0_i32, %c0_i32_0 : i32, i32
  }
  func.func @transform_17(%arg0: i32) -> (i32, i32) {
    %c0_i32 = arith.constant 0 : i32
    %c0_i32_0 = arith.constant 0 : i32
    return %arg0, %c0_i32 : i32, i32
  }
  func.func @transform_18(%arg0: i32) -> (i32, i32) {
    %c0_i32 = arith.constant 0 : i32
    %c0_i32_0 = arith.constant 0 : i32
    return %arg0, %c0_i32 : i32, i32
  }
  func.func @transform_19(%arg0: i32) -> (i32, i32) {
    %c0_i32 = arith.constant 0 : i32
    %c0_i32_0 = arith.constant 0 : i32
    return %arg0, %c0_i32 : i32, i32
  }
}

</mosaic_0001>

<llo_original>
// kernel: m2_forward.1
$region0: #{m2_forward.1}
  #allocation0 [shape = 'u32[]', space=smem, size = 0x4, offset = 0x4, fixed_abs, tag = 'smem constant byte address 0x4 - core index']
  #allocation1 [shape = 'u32[144,128]{1,0:T(1,128)}', space=vmem, size = 0x12000, scoped, tag = 'internal scratch']
  %s0 = inlined_call_operand.vmem [shape: f32[8,32], index: 0, kind: input, shape index: {}]
  %s1 = inlined_call_operand.vmem [shape: f32[8,4], index: 1, kind: input, shape index: {}]
  %s2 = inlined_call_operand.vmem [shape: f32[8,16], index: 2, kind: input, shape index: {}]
  %s3 = inlined_call_operand.vmem [shape: f32[32,64], index: 3, kind: input, shape index: {}]
  %s4 = inlined_call_operand.hbm [shape: f32[4,64], index: 4, kind: input, shape index: {}]
  %s5 = inlined_call_operand.vmem [shape: f32[1,64], index: 5, kind: input, shape index: {}]
  %s6 = inlined_call_operand.vmem [shape: f32[64,64], index: 6, kind: input, shape index: {}]
  %s7 = inlined_call_operand.vmem [shape: f32[1,64], index: 7, kind: input, shape index: {}]
  %s8 = inlined_call_operand.vmem [shape: f32[64,32], index: 8, kind: input, shape index: {}]
  %s9 = inlined_call_operand.hbm [shape: f32[1,32], index: 9, kind: input, shape index: {}]
  %s10 = inlined_call_operand.vmem [shape: f32[16,64], index: 10, kind: input, shape index: {}]
  %s11 = inlined_call_operand.vmem [shape: f32[4,64], index: 11, kind: input, shape index: {}]
  %s12 = inlined_call_operand.vmem [shape: f32[1,64], index: 12, kind: input, shape index: {}]
  %s13 = inlined_call_operand.vmem [shape: f32[64,64], index: 13, kind: input, shape index: {}]
  %s14 = inlined_call_operand.vmem [shape: f32[1,64], index: 14, kind: input, shape index: {}]
  %s15 = inlined_call_operand.vmem [shape: f32[64,32], index: 15, kind: input, shape index: {}]
  %s16 = inlined_call_operand.vmem [shape: f32[1,32], index: 16, kind: input, shape index: {}]
  %s17 = inlined_call_operand.hbm [shape: f32[8,32], index: 17, kind: output, shape index: {0}]
  %s18 = inlined_call_operand.hbm [shape: f32[8,16], index: 18, kind: output, shape index: {1}]
  %s19 = inlined_call_operand.hbm [shape: f32[8,16], index: 19, kind: output, shape index: {2}]
  %20 = xla_tuple %s17, %s18, %s19
  %s21 = sld [smem:[#allocation0]]
  $region102: #{m2_forward.1} parent=0
    _
  %s23 = ssub.s32 1, %s21
  %s24 = scalar_select 0, %s23, %s21
  $region1: #{m2_forward.1} parent=0
    #allocation2 [shape = 'u8[2048]{0}', space=vmem, size = 0x800, scoped, tag = 'input window, operand 4, single buffered']
    #allocation3 [shape = 's32[1]{0}', space=sflag, size = 0x4, scoped, tag = 'scoped memory for m2_forward.1']
    #allocation4 [shape = 's32[1]{0}', space=sflag, size = 0x4, scoped, tag = 'scoped memory for m2_forward.1']
    #allocation5 [shape = 'u8[512]{0}', space=vmem, size = 0x400, scoped, tag = 'input window, operand 9, single buffered']
    #allocation6 [shape = 's32[1]{0}', space=sflag, size = 0x4, scoped, tag = 'scoped memory for m2_forward.1']
    #allocation7 [shape = 'u8[4096]{0}', space=vmem, size = 0x1000, scoped, tag = 'output window, operand 0, single buffered']
    #allocation8 [shape = 'u8[4096]{0}', space=vmem, size = 0x1000, scoped, tag = 'output window, operand 1, single buffered']
    #allocation9 [shape = 's32[1]{0}', space=sflag, size = 0x4, scoped, tag = 'scoped memory for m2_forward.1']
    #allocation10 [shape = 'u8[4096]{0}', space=vmem, size = 0x1000, scoped, tag = 'output window, operand 2, single buffered']
    %25 = vsyncpa [#allocation3], 0
    %26 = vsyncpa [#allocation6], 0
    %27 = vsyncpa [#allocation4], 0
    %28 = vsyncpa [#allocation9], 0
    // Predicated region
    $region2: #{m2_forward.1} parent=1 // pred_check
      _
    $region3: #{m2_forward.1} parent=1 // pred_check_branch
      %30 = sbr.rel (0) target = $region5
    $region4: #{m2_forward.1} parent=1 // pred_region
      _
    $region5: #{m2_forward.1} parent=1 // pred_fallthru
      _
    // Predicated region
    $region6: #{m2_forward.1} parent=1 // pred_check
      _
    $region7: #{m2_forward.1} parent=1 // pred_check_branch
      %32 = sbr.rel (0) target = $region9
    $region8: #{m2_forward.1} parent=1 // pred_region
      _
    $region9: #{m2_forward.1} parent=1 // pred_fallthru
      _
    // Predicated region
    $region10: #{m2_forward.1} parent=1 // pred_check
      _
    $region11: #{m2_forward.1} parent=1 // pred_check_branch
      %34 = sbr.rel (0) target = $region13
    $region12: #{m2_forward.1} parent=1 // pred_region
      _
    $region13: #{m2_forward.1} parent=1 // pred_fallthru
      _
    // Predicated region
    $region14: #{m2_forward.1} parent=1 // pred_check
      _
    $region15: #{m2_forward.1} parent=1 // pred_check_branch
      %36 = sbr.rel (0) target = $region17
    $region16: #{m2_forward.1} parent=1 // pred_region
      _
    $region17: #{m2_forward.1} parent=1 // pred_fallthru
      _
    // Predicated region
    $region18: #{m2_forward.1} parent=1 // pred_check
      _
    $region19: #{m2_forward.1} parent=1 // pred_check_branch
      %38 = sbr.rel (0) target = $region21
    $region20: #{m2_forward.1} parent=1 // pred_region
      %s40 = ssub.s32 64, 64
      %41 = vsyncadd [#allocation3], %s40
      %s43 = sshll.u32 [#allocation2], 4
      %s44 = int_to_ptr.vmem [resolvable:$true] %s43
      %46 = dma.hbm_to_vmem [thread:$0]  %s4, 64, %s44, [#allocation3]
    $region21: #{m2_forward.1} parent=1 // pred_fallthru
      _
    // Predicated region
    $region22: #{m2_forward.1} parent=1 // pred_check
      _
    $region23: #{m2_forward.1} parent=1 // pred_check_branch
      %48 = sbr.rel (0) target = $region25
    $region24: #{m2_forward.1} parent=1 // pred_region
      _
    $region25: #{m2_forward.1} parent=1 // pred_fallthru
      _
    // Predicated region
    $region26: #{m2_forward.1} parent=1 // pred_check
      _
    $region27: #{m2_forward.1} parent=1 // pred_check_branch
      %50 = sbr.rel (0) target = $region29
    $region28: #{m2_forward.1} parent=1 // pred_region
      _
    $region29: #{m2_forward.1} parent=1 // pred_fallthru
      _
    // Predicated region
    $region30: #{m2_forward.1} parent=1 // pred_check
      _
    $region31: #{m2_forward.1} parent=1 // pred_check_branch
      %52 = sbr.rel (0) target = $region33
    $region32: #{m2_forward.1} parent=1 // pred_region
      _
    $region33: #{m2_forward.1} parent=1 // pred_fallthru
      _
    // Predicated region
    $region34: #{m2_forward.1} parent=1 // pred_check
      _
    $region35: #{m2_forward.1} parent=1 // pred_check_branch
      %54 = sbr.rel (0) target = $region37
    $region36: #{m2_forward.1} parent=1 // pred_region
      _
    $region37: #{m2_forward.1} parent=1 // pred_fallthru
      _
    // Predicated region
    $region38: #{m2_forward.1} parent=1 // pred_check
      _
    $region39: #{m2_forward.1} parent=1 // pred_check_branch
      %56 = sbr.rel (0) target = $region41
    $region40: #{m2_forward.1} parent=1 // pred_region
      %s58 = ssub.s32 16, 16
      %59 = vsyncadd [#allocation6], %s58
      %s61 = sshll.u32 [#allocation5], 4
      %s62 = int_to_ptr.vmem [resolvable:$true] %s61
      %64 = dma.hbm_to_vmem [thread:$0]  %s9, 16, %s62, [#allocation6]
    $region41: #{m2_forward.1} parent=1 // pred_fallthru
      _
    // Predicated region
    $region42: #{m2_forward.1} parent=1 // pred_check
      _
    $region43: #{m2_forward.1} parent=1 // pred_check_branch
      %66 = sbr.rel (0) target = $region45
    $region44: #{m2_forward.1} parent=1 // pred_region
      _
    $region45: #{m2_forward.1} parent=1 // pred_fallthru
      _
    // Predicated region
    $region46: #{m2_forward.1} parent=1 // pred_check
      _
    $region47: #{m2_forward.1} parent=1 // pred_check_branch
      %68 = sbr.rel (0) target = $region49
    $region48: #{m2_forward.1} parent=1 // pred_region
      _
    $region49: #{m2_forward.1} parent=1 // pred_fallthru
      _
    // Predicated region
    $region50: #{m2_forward.1} parent=1 // pred_check
      _
    $region51: #{m2_forward.1} parent=1 // pred_check_branch
      %70 = sbr.rel (0) target = $region53
    $region52: #{m2_forward.1} parent=1 // pred_region
      _
    $region53: #{m2_forward.1} parent=1 // pred_fallthru
      _
    // Predicated region
    $region54: #{m2_forward.1} parent=1 // pred_check
      _
    $region55: #{m2_forward.1} parent=1 // pred_check_branch
      %72 = sbr.rel (0) target = $region57
    $region56: #{m2_forward.1} parent=1 // pred_region
      _
    $region57: #{m2_forward.1} parent=1 // pred_fallthru
      _
    // Predicated region
    $region58: #{m2_forward.1} parent=1 // pred_check
      _
    $region59: #{m2_forward.1} parent=1 // pred_check_branch
      %74 = sbr.rel (0) target = $region61
    $region60: #{m2_forward.1} parent=1 // pred_region
      _
    $region61: #{m2_forward.1} parent=1 // pred_fallthru
      _
    // Predicated region
    $region62: #{m2_forward.1} parent=1 // pred_check
      _
    $region63: #{m2_forward.1} parent=1 // pred_check_branch
      %76 = sbr.rel (0) target = $region65
    $region64: #{m2_forward.1} parent=1 // pred_region
      _
    $region65: #{m2_forward.1} parent=1 // pred_fallthru
      _
    // Predicated region
    $region66: #{m2_forward.1} parent=1 // pred_check
      _
    $region67: #{m2_forward.1} parent=1 // pred_check_branch
      %78 = sbr.rel (0) target = $region69
    $region68: #{m2_forward.1} parent=1 // pred_region
      _
    $region69: #{m2_forward.1} parent=1 // pred_fallthru
      _
    // Predicated region
    $region70: #{m2_forward.1} parent=1 // pred_check
      _
    $region71: #{m2_forward.1} parent=1 // pred_check_branch
      %80 = sbr.rel (0) target = $region73
    $region72: #{m2_forward.1} parent=1 // pred_region
      %81 = dma.done [#allocation3], 64
    $region73: #{m2_forward.1} parent=1 // pred_fallthru
      _
    // Predicated region
    $region74: #{m2_forward.1} parent=1 // pred_check
      _
    $region75: #{m2_forward.1} parent=1 // pred_check_branch
      %83 = sbr.rel (0) target = $region77
    $region76: #{m2_forward.1} parent=1 // pred_region
      %84 = dma.done [#allocation6], 16
    $region77: #{m2_forward.1} parent=1 // pred_fallthru
      _
    %v85 = vld [vmem:[%s0] sm:$0xff]
    %v86 = vld [vmem:[%s1] sm:$0xff]
    %v87 = vld [vmem:[%s2] sm:$0xff]
    %v88 = vld [vmem:[%s3] sm:$0xff]
    %v89 = vld [vmem:[%s3 + $0x8] sm:$0xff]
    %v90 = vld [vmem:[%s3 + $0x10] sm:$0xff]
    %v91 = vld [vmem:[%s3 + $0x18] sm:$0xff]
    %v92 = vld [vmem:[#allocation2] sm:$0xf]
    %vm93 = vcmask 31744
    %v95 = vsel %vm93, %v86, 0
    %vm97 = vcmask 1043456
    %v99 = vsel %vm97, %v92, 0
    %101 = vmatprep.subr.mxu0 0.0
    %102 = vmatpush1.msra.mxu0 %v99
    %103 = vmatprep.subr.mxu0 0.0
    %104 = vmatpush1.msra.mxu0 0.0
    %105 = vmatprep.subr.mxu0 0.0
    %106 = vmatpush1.msra.mxu0 0.0
    %107 = vmatprep.subr.mxu0 0.0
    %108 = vmatpush1.msra.mxu0 0.0
    %109 = vmatprep.subr.mxu0 0.0
    %110 = vmatpush1.msra.mxu0 0.0
    %111 = vmatprep.subr.mxu0 0.0
    %112 = vmatpush1.msra.mxu0 0.0
    %113 = vmatprep.subr.mxu0 0.0
    %114 = vmatpush1.msra.mxu0 0.0
    %115 = vmatprep.subr.mxu0 0.0
    %116 = vmatpush1.msra.mxu0 0.0
    %117 = vmatprep.subr.mxu0 0.0
    %118 = vmatpush1.msra.mxu0 0.0
    %119 = vmatprep.subr.mxu0 0.0
    %120 = vmatpush1.msra.mxu0 0.0
    %121 = vmatprep.subr.mxu0 0.0
    %122 = vmatpush1.msra.mxu0 0.0
    %123 = vmatprep.subr.mxu0 0.0
    %124 = vmatpush1.msra.mxu0 0.0
    %125 = vmatprep.subr.mxu0 0.0
    %126 = vmatpush1.msra.mxu0 0.0
    %127 = vmatprep.subr.mxu0 0.0
    %128 = vmatpush1.msra.mxu0 0.0
    %129 = vmatprep.subr.mxu0 0.0
    %130 = vmatpush1.msra.mxu0 0.0
    %131 = vmatprep.subr.mxu0 0.0
    %132 = vmatpush1.msra.mxu0 0.0
    %133 = vmatprep.subr.mxu0 0.0
    %134 = vmatpush1.msra.mxu0 0.0
    %135 = vmatprep.subr.mxu0 0.0
    %136 = vmatpush1.msra.mxu0 0.0
    %137 = vmatprep.subr.mxu0 0.0
    %138 = vmatpush1.msra.mxu0 0.0
    %139 = vmatprep.subr.mxu0 0.0
    %140 = vmatpush1.msra.mxu0 0.0
    %141 = vmatprep.subr.mxu0 0.0
    %142 = vmatpush1.msra.mxu0 0.0
    %143 = vmatprep.subr.mxu0 0.0
    %144 = vmatpush1.msra.mxu0 0.0
    %145 = vmatprep.subr.mxu0 0.0
    %146 = vmatpush1.msra.mxu0 0.0
    %147 = vmatprep.subr.mxu0 0.0
    %148 = vmatpush1.msra.mxu0 0.0
    %149 = vmatprep.subr.mxu0 0.0
    %150 = vmatpush1.msra.mxu0 0.0
    %151 = vmatprep.subr.mxu0 0.0
    %152 = vmatpush1.msra.mxu0 0.0
    %153 = vmatprep.subr.mxu0 0.0
    %154 = vmatpush1.msra.mxu0 0.0
    %155 = vmatprep.subr.mxu0 0.0
    %156 = vmatpush1.msra.mxu0 0.0
    %157 = vmatprep.subr.mxu0 0.0
    %158 = vmatpush1.msra.mxu0 0.0
    %159 = vmatprep.subr.mxu0 0.0
    %160 = vmatpush1.msra.mxu0 0.0
    %161 = vmatprep.subr.mxu0 0.0
    %162 = vmatpush1.msra.mxu0 0.0
    %163 = vmatprep.subr.mxu0 0.0
    %164 = vmatpush1.msra.mxu0 0.0
    %165 = vmatprep.mubr.f32.mxu0 0.0
    %166 = vmatmul.mubr.f32.gmra.mrb[0].mxu0 %v95
    %v167 = vpop.f32.mrb[0].mxu0
    %v168 = vadd.f32 0.0, %v167
    %v169 = vpop.f32.mrb[0].mxu0
    %170 = vdwg.mxu0
    %vm171 = vcmask 261120
    %v173 = vsel %vm171, %v85, 0
    %175 = vmatprep.subr.mxu0 0.0
    %176 = vmatpush1.msra.mxu0 %v88
    %177 = vmatprep.subr.mxu0 0.0
    %178 = vmatpush1.msra.mxu0 %v89
    %179 = vmatprep.subr.mxu0 0.0
    %180 = vmatpush1.msra.mxu0 %v90
    %181 = vmatprep.subr.mxu0 0.0
    %182 = vmatpush1.msra.mxu0 %v91
    %183 = vmatprep.subr.mxu0 0.0
    %184 = vmatpush1.msra.mxu0 0.0
    %185 = vmatprep.subr.mxu0 0.0
    %186 = vmatpush1.msra.mxu0 0.0
    %187 = vmatprep.subr.mxu0 0.0
    %188 = vmatpush1.msra.mxu0 0.0
    %189 = vmatprep.subr.mxu0 0.0
    %190 = vmatpush1.msra.mxu0 0.0
    %191 = vmatprep.subr.mxu0 0.0
    %192 = vmatpush1.msra.mxu0 0.0
    %193 = vmatprep.subr.mxu0 0.0
    %194 = vmatpush1.msra.mxu0 0.0
    %195 = vmatprep.subr.mxu0 0.0
    %196 = vmatpush1.msra.mxu0 0.0
    %197 = vmatprep.subr.mxu0 0.0
    %198 = vmatpush1.msra.mxu0 0.0
    %199 = vmatprep.subr.mxu0 0.0
    %200 = vmatpush1.msra.mxu0 0.0
    %201 = vmatprep.subr.mxu0 0.0
    %202 = vmatpush1.msra.mxu0 0.0
    %203 = vmatprep.subr.mxu0 0.0
    %204 = vmatpush1.msra.mxu0 0.0
    %205 = vmatprep.subr.mxu0 0.0
    %206 = vmatpush1.msra.mxu0 0.0
    %207 = vmatprep.subr.mxu0 0.0
    %208 = vmatpush1.msra.mxu0 0.0
    %209 = vmatprep.subr.mxu0 0.0
    %210 = vmatpush1.msra.mxu0 0.0
    %211 = vmatprep.subr.mxu0 0.0
    %212 = vmatpush1.msra.mxu0 0.0
    %213 = vmatprep.subr.mxu0 0.0
    %214 = vmatpush1.msra.mxu0 0.0
    %215 = vmatprep.subr.mxu0 0.0
    %216 = vmatpush1.msra.mxu0 0.0
    %217 = vmatprep.subr.mxu0 0.0
    %218 = vmatpush1.msra.mxu0 0.0
    %219 = vmatprep.subr.mxu0 0.0
    %220 = vmatpush1.msra.mxu0 0.0
    %221 = vmatprep.subr.mxu0 0.0
    %222 = vmatpush1.msra.mxu0 0.0
    %223 = vmatprep.subr.mxu0 0.0
    %224 = vmatpush1.msra.mxu0 0.0
    %225 = vmatprep.subr.mxu0 0.0
    %226 = vmatpush1.msra.mxu0 0.0
    %227 = vmatprep.subr.mxu0 0.0
    %228 = vmatpush1.msra.mxu0 0.0
    %229 = vmatprep.subr.mxu0 0.0
    %230 = vmatpush1.msra.mxu0 0.0
    %231 = vmatprep.subr.mxu0 0.0
    %232 = vmatpush1.msra.mxu0 0.0
    %233 = vmatprep.subr.mxu0 0.0
    %234 = vmatpush1.msra.mxu0 0.0
    %235 = vmatprep.subr.mxu0 0.0
    %236 = vmatpush1.msra.mxu0 0.0
    %237 = vmatprep.subr.mxu0 0.0
    %238 = vmatpush1.msra.mxu0 0.0
    %239 = vmatprep.mubr.f32.mxu0 0.0
    %240 = vmatmul.mubr.f32.gmra.mrb[0].mxu0 %v173
    %v241 = vpop.f32.mrb[0].mxu0
    %v242 = vadd.f32 %v168, %v241
    %v243 = vpop.f32.mrb[0].mxu0
    %244 = vdwg.mxu0
    %v245 = vld [vmem:[%s5] sm:$0x1]
    %v247 = vlaneseq
    %v248 = vshrl.u32 %v247, 7
    %v249 = vsub.s32 0, %v248
    %v250 = vrot.slane %v245, %v249
    %v252 = vadd.f32 %v242, %v250
    %v253 = vmax.f32 %v252, 0.0
    %v254 = vld [vmem:[%s6] sm:$0xff]
    %v255 = vld [vmem:[%s6 + $0x8] sm:$0xff]
    %v256 = vld [vmem:[%s6 + $0x10] sm:$0xff]
    %v257 = vld [vmem:[%s6 + $0x18] sm:$0xff]
    %v258 = vld [vmem:[%s6 + $0x20] sm:$0xff]
    %v259 = vld [vmem:[%s6 + $0x28] sm:$0xff]
    %v260 = vld [vmem:[%s6 + $0x30] sm:$0xff]
    %v261 = vld [vmem:[%s6 + $0x38] sm:$0xff]
    %v262 = vld [vmem:[%s7] sm:$0x1]
    %v264 = vlaneseq
    %v265 = vshrl.u32 %v264, 7
    %v266 = vsub.s32 0, %v265
    %v267 = vrot.slane %v262, %v266
    %vm269 = vcmask 523264
    %v271 = vsel %vm269, %v253, 0
    %273 = vmatprep.subr.mxu0 0.0
    %274 = vmatpush1.msra.mxu0 %v254
    %275 = vmatprep.subr.mxu0 0.0
    %276 = vmatpush1.msra.mxu0 %v255
    %277 = vmatprep.subr.mxu0 0.0
    %278 = vmatpush1.msra.mxu0 %v256
    %279 = vmatprep.subr.mxu0 0.0
    %280 = vmatpush1.msra.mxu0 %v257
    %281 = vmatprep.subr.mxu0 0.0
    %282 = vmatpush1.msra.mxu0 %v258
    %283 = vmatprep.subr.mxu0 0.0
    %284 = vmatpush1.msra.mxu0 %v259
    %285 = vmatprep.subr.mxu0 0.0
    %286 = vmatpush1.msra.mxu0 %v260
    %287 = vmatprep.subr.mxu0 0.0
    %288 = vmatpush1.msra.mxu0 %v261
    %289 = vmatprep.subr.mxu0 0.0
    %290 = vmatpush1.msra.mxu0 0.0
    %291 = vmatprep.subr.mxu0 0.0
    %292 = vmatpush1.msra.mxu0 0.0
    %293 = vmatprep.subr.mxu0 0.0
    %294 = vmatpush1.msra.mxu0 0.0
    %295 = vmatprep.subr.mxu0 0.0
    %296 = vmatpush1.msra.mxu0 0.0
    %297 = vmatprep.subr.mxu0 0.0
    %298 = vmatpush1.msra.mxu0 0.0
    %299 = vmatprep.subr.mxu0 0.0
    %300 = vmatpush1.msra.mxu0 0.0
    %301 = vmatprep.subr.mxu0 0.0
    %302 = vmatpush1.msra.mxu0 0.0
    %303 = vmatprep.subr.mxu0 0.0
    %304 = vmatpush1.msra.mxu0 0.0
    %305 = vmatprep.subr.mxu0 0.0
    %306 = vmatpush1.msra.mxu0 0.0
    %307 = vmatprep.subr.mxu0 0.0
    %308 = vmatpush1.msra.mxu0 0.0
    %309 = vmatprep.subr.mxu0 0.0
    %310 = vmatpush1.msra.mxu0 0.0
    %311 = vmatprep.subr.mxu0 0.0
    %312 = vmatpush1.msra.mxu0 0.0
    %313 = vmatprep.subr.mxu0 0.0
    %314 = vmatpush1.msra.mxu0 0.0
    %315 = vmatprep.subr.mxu0 0.0
    %316 = vmatpush1.msra.mxu0 0.0
    %317 = vmatprep.subr.mxu0 0.0
    %318 = vmatpush1.msra.mxu0 0.0
    %319 = vmatprep.subr.mxu0 0.0
    %320 = vmatpush1.msra.mxu0 0.0
    %321 = vmatprep.subr.mxu0 0.0
    %322 = vmatpush1.msra.mxu0 0.0
    %323 = vmatprep.subr.mxu0 0.0
    %324 = vmatpush1.msra.mxu0 0.0
    %325 = vmatprep.subr.mxu0 0.0
    %326 = vmatpush1.msra.mxu0 0.0
    %327 = vmatprep.subr.mxu0 0.0
    %328 = vmatpush1.msra.mxu0 0.0
    %329 = vmatprep.subr.mxu0 0.0
    %330 = vmatpush1.msra.mxu0 0.0
    %331 = vmatprep.subr.mxu0 0.0
    %332 = vmatpush1.msra.mxu0 0.0
    %333 = vmatprep.subr.mxu0 0.0
    %334 = vmatpush1.msra.mxu0 0.0
    %335 = vmatprep.subr.mxu0 0.0
    %336 = vmatpush1.msra.mxu0 0.0
    %337 = vmatprep.mubr.f32.mxu0 0.0
    %338 = vmatmul.mubr.f32.gmra.mrb[0].mxu0 %v271
    %v339 = vpop.f32.mrb[0].mxu0
    %v340 = vadd.f32 %v267, %v339
    %v341 = vpop.f32.mrb[0].mxu0
    %342 = vdwg.mxu0
    %v343 = vmax.f32 %v340, 0.0
    %v344 = vld [vmem:[%s8] sm:$0xff]
    %v345 = vld [vmem:[%s8 + $0x8] sm:$0xff]
    %v346 = vld [vmem:[%s8 + $0x10] sm:$0xff]
    %v347 = vld [vmem:[%s8 + $0x18] sm:$0xff]
    %v348 = vld [vmem:[%s8 + $0x20] sm:$0xff]
    %v349 = vld [vmem:[%s8 + $0x28] sm:$0xff]
    %v350 = vld [vmem:[%s8 + $0x30] sm:$0xff]
    %v351 = vld [vmem:[%s8 + $0x38] sm:$0xff]
    %v352 = vld [vmem:[#allocation5] sm:$0x1]
    %v354 = vlaneseq
    %v355 = vshrl.u32 %v354, 7
    %v356 = vsub.s32 0, %v355
    %v357 = vrot.slane %v352, %v356
    %v360 = vsel %vm269, %v343, 0
    %362 = vmatprep.subr.mxu0 0.0
    %363 = vmatpush1.msra.mxu0 %v344
    %364 = vmatprep.subr.mxu0 0.0
    %365 = vmatpush1.msra.mxu0 %v345
    %366 = vmatprep.subr.mxu0 0.0
    %367 = vmatpush1.msra.mxu0 %v346
    %368 = vmatprep.subr.mxu0 0.0
    %369 = vmatpush1.msra.mxu0 %v347
    %370 = vmatprep.subr.mxu0 0.0
    %371 = vmatpush1.msra.mxu0 %v348
    %372 = vmatprep.subr.mxu0 0.0
    %373 = vmatpush1.msra.mxu0 %v349
    %374 = vmatprep.subr.mxu0 0.0
    %375 = vmatpush1.msra.mxu0 %v350
    %376 = vmatprep.subr.mxu0 0.0
    %377 = vmatpush1.msra.mxu0 %v351
    %378 = vmatprep.subr.mxu0 0.0
    %379 = vmatpush1.msra.mxu0 0.0
    %380 = vmatprep.subr.mxu0 0.0
    %381 = vmatpush1.msra.mxu0 0.0
    %382 = vmatprep.subr.mxu0 0.0
    %383 = vmatpush1.msra.mxu0 0.0
    %384 = vmatprep.subr.mxu0 0.0
    %385 = vmatpush1.msra.mxu0 0.0
    %386 = vmatprep.subr.mxu0 0.0
    %387 = vmatpush1.msra.mxu0 0.0
    %388 = vmatprep.subr.mxu0 0.0
    %389 = vmatpush1.msra.mxu0 0.0
    %390 = vmatprep.subr.mxu0 0.0
    %391 = vmatpush1.msra.mxu0 0.0
    %392 = vmatprep.subr.mxu0 0.0
    %393 = vmatpush1.msra.mxu0 0.0
    %394 = vmatprep.subr.mxu0 0.0
    %395 = vmatpush1.msra.mxu0 0.0
    %396 = vmatprep.subr.mxu0 0.0
    %397 = vmatpush1.msra.mxu0 0.0
    %398 = vmatprep.subr.mxu0 0.0
    %399 = vmatpush1.msra.mxu0 0.0
    %400 = vmatprep.subr.mxu0 0.0
    %401 = vmatpush1.msra.mxu0 0.0
    %402 = vmatprep.subr.mxu0 0.0
    %403 = vmatpush1.msra.mxu0 0.0
    %404 = vmatprep.subr.mxu0 0.0
    %405 = vmatpush1.msra.mxu0 0.0
    %406 = vmatprep.subr.mxu0 0.0
    %407 = vmatpush1.msra.mxu0 0.0
    %408 = vmatprep.subr.mxu0 0.0
    %409 = vmatpush1.msra.mxu0 0.0
    %410 = vmatprep.subr.mxu0 0.0
    %411 = vmatpush1.msra.mxu0 0.0
    %412 = vmatprep.subr.mxu0 0.0
    %413 = vmatpush1.msra.mxu0 0.0
    %414 = vmatprep.subr.mxu0 0.0
    %415 = vmatpush1.msra.mxu0 0.0
    %416 = vmatprep.subr.mxu0 0.0
    %417 = vmatpush1.msra.mxu0 0.0
    %418 = vmatprep.subr.mxu0 0.0
    %419 = vmatpush1.msra.mxu0 0.0
    %420 = vmatprep.subr.mxu0 0.0
    %421 = vmatpush1.msra.mxu0 0.0
    %422 = vmatprep.subr.mxu0 0.0
    %423 = vmatpush1.msra.mxu0 0.0
    %424 = vmatprep.subr.mxu0 0.0
    %425 = vmatpush1.msra.mxu0 0.0
    %426 = vmatprep.mubr.f32.mxu0 0.0
    %427 = vmatmul.mubr.f32.gmra.mrb[0].mxu0 %v360
    %v428 = vpop.f32.mrb[0].mxu0
    %v429 = vadd.f32 %v357, %v428
    %v430 = vpop.f32.mrb[0].mxu0
    %431 = vdwg.mxu0
    %v432 = vmul.f32 %v429, 0.5
    %v433 = vmul.f32 %v432, 1.442695
    %v434 = vpow.pop %v433
    %436 = vrot.lane.b32.xlu0 %v434, 112
    %v437 = vpop.permute.xlu0 %436
    %v439 = vmul.f32 %v87, %v437
    %v440 = vadd.f32 %v429, %v439
    %v441 = vld [vmem:[%s10] sm:$0xff]
    %v442 = vld [vmem:[%s10 + $0x8] sm:$0xff]
    %v443 = vld [vmem:[%s11] sm:$0xf]
    %v445 = vsel %vm97, %v443, 0
    %447 = vmatprep.subr.mxu0 0.0
    %448 = vmatpush1.msra.mxu0 %v445
    %449 = vmatprep.subr.mxu0 0.0
    %450 = vmatpush1.msra.mxu0 0.0
    %451 = vmatprep.subr.mxu0 0.0
    %452 = vmatpush1.msra.mxu0 0.0
    %453 = vmatprep.subr.mxu0 0.0
    %454 = vmatpush1.msra.mxu0 0.0
    %455 = vmatprep.subr.mxu0 0.0
    %456 = vmatpush1.msra.mxu0 0.0
    %457 = vmatprep.subr.mxu0 0.0
    %458 = vmatpush1.msra.mxu0 0.0
    %459 = vmatprep.subr.mxu0 0.0
    %460 = vmatpush1.msra.mxu0 0.0
    %461 = vmatprep.subr.mxu0 0.0
    %462 = vmatpush1.msra.mxu0 0.0
    %463 = vmatprep.subr.mxu0 0.0
    %464 = vmatpush1.msra.mxu0 0.0
    %465 = vmatprep.subr.mxu0 0.0
    %466 = vmatpush1.msra.mxu0 0.0
    %467 = vmatprep.subr.mxu0 0.0
    %468 = vmatpush1.msra.mxu0 0.0
    %469 = vmatprep.subr.mxu0 0.0
    %470 = vmatpush1.msra.mxu0 0.0
    %471 = vmatprep.subr.mxu0 0.0
    %472 = vmatpush1.msra.mxu0 0.0
    %473 = vmatprep.subr.mxu0 0.0
    %474 = vmatpush1.msra.mxu0 0.0
    %475 = vmatprep.subr.mxu0 0.0
    %476 = vmatpush1.msra.mxu0 0.0
    %477 = vmatprep.subr.mxu0 0.0
    %478 = vmatpush1.msra.mxu0 0.0
    %479 = vmatprep.subr.mxu0 0.0
    %480 = vmatpush1.msra.mxu0 0.0
    %481 = vmatprep.subr.mxu0 0.0
    %482 = vmatpush1.msra.mxu0 0.0
    %483 = vmatprep.subr.mxu0 0.0
    %484 = vmatpush1.msra.mxu0 0.0
    %485 = vmatprep.subr.mxu0 0.0
    %486 = vmatpush1.msra.mxu0 0.0
    %487 = vmatprep.subr.mxu0 0.0
    %488 = vmatpush1.msra.mxu0 0.0
    %489 = vmatprep.subr.mxu0 0.0
    %490 = vmatpush1.msra.mxu0 0.0
    %491 = vmatprep.subr.mxu0 0.0
    %492 = vmatpush1.msra.mxu0 0.0
    %493 = vmatprep.subr.mxu0 0.0
    %494 = vmatpush1.msra.mxu0 0.0
    %495 = vmatprep.subr.mxu0 0.0
    %496 = vmatpush1.msra.mxu0 0.0
    %497 = vmatprep.subr.mxu0 0.0
    %498 = vmatpush1.msra.mxu0 0.0
    %499 = vmatprep.subr.mxu0 0.0
    %500 = vmatpush1.msra.mxu0 0.0
    %501 = vmatprep.subr.mxu0 0.0
    %502 = vmatpush1.msra.mxu0 0.0
    %503 = vmatprep.subr.mxu0 0.0
    %504 = vmatpush1.msra.mxu0 0.0
    %505 = vmatprep.subr.mxu0 0.0
    %506 = vmatpush1.msra.mxu0 0.0
    %507 = vmatprep.subr.mxu0 0.0
    %508 = vmatpush1.msra.mxu0 0.0
    %509 = vmatprep.subr.mxu0 0.0
    %510 = vmatpush1.msra.mxu0 0.0
    %511 = vmatprep.mubr.f32.mxu0 0.0
    %512 = vmatmul.mubr.f32.gmra.mrb[0].mxu0 %v95
    %v513 = vpop.f32.mrb[0].mxu0
    %v514 = vadd.f32 0.0, %v513
    %v515 = vpop.f32.mrb[0].mxu0
    %516 = vdwg.mxu0
    %vm517 = vcmask 130048
    %v519 = vsel %vm517, %v440, 0
    %521 = vmatprep.subr.mxu0 0.0
    %522 = vmatpush1.msra.mxu0 %v441
    %523 = vmatprep.subr.mxu0 0.0
    %524 = vmatpush1.msra.mxu0 %v442
    %525 = vmatprep.subr.mxu0 0.0
    %526 = vmatpush1.msra.mxu0 0.0
    %527 = vmatprep.subr.mxu0 0.0
    %528 = vmatpush1.msra.mxu0 0.0
    %529 = vmatprep.subr.mxu0 0.0
    %530 = vmatpush1.msra.mxu0 0.0
    %531 = vmatprep.subr.mxu0 0.0
    %532 = vmatpush1.msra.mxu0 0.0
    %533 = vmatprep.subr.mxu0 0.0
    %534 = vmatpush1.msra.mxu0 0.0
    %535 = vmatprep.subr.mxu0 0.0
    %536 = vmatpush1.msra.mxu0 0.0
    %537 = vmatprep.subr.mxu0 0.0
    %538 = vmatpush1.msra.mxu0 0.0
    %539 = vmatprep.subr.mxu0 0.0
    %540 = vmatpush1.msra.mxu0 0.0
    %541 = vmatprep.subr.mxu0 0.0
    %542 = vmatpush1.msra.mxu0 0.0
    %543 = vmatprep.subr.mxu0 0.0
    %544 = vmatpush1.msra.mxu0 0.0
    %545 = vmatprep.subr.mxu0 0.0
    %546 = vmatpush1.msra.mxu0 0.0
    %547 = vmatprep.subr.mxu0 0.0
    %548 = vmatpush1.msra.mxu0 0.0
    %549 = vmatprep.subr.mxu0 0.0
    %550 = vmatpush1.msra.mxu0 0.0
    %551 = vmatprep.subr.mxu0 0.0
    %552 = vmatpush1.msra.mxu0 0.0
    %553 = vmatprep.subr.mxu0 0.0
    %554 = vmatpush1.msra.mxu0 0.0
    %555 = vmatprep.subr.mxu0 0.0
    %556 = vmatpush1.msra.mxu0 0.0
    %557 = vmatprep.subr.mxu0 0.0
    %558 = vmatpush1.msra.mxu0 0.0
    %559 = vmatprep.subr.mxu0 0.0
    %560 = vmatpush1.msra.mxu0 0.0
    %561 = vmatprep.subr.mxu0 0.0
    %562 = vmatpush1.msra.mxu0 0.0
    %563 = vmatprep.subr.mxu0 0.0
    %564 = vmatpush1.msra.mxu0 0.0
    %565 = vmatprep.subr.mxu0 0.0
    %566 = vmatpush1.msra.mxu0 0.0
    %567 = vmatprep.subr.mxu0 0.0
    %568 = vmatpush1.msra.mxu0 0.0
    %569 = vmatprep.subr.mxu0 0.0
    %570 = vmatpush1.msra.mxu0 0.0
    %571 = vmatprep.subr.mxu0 0.0
    %572 = vmatpush1.msra.mxu0 0.0
    %573 = vmatprep.subr.mxu0 0.0
    %574 = vmatpush1.msra.mxu0 0.0
    %575 = vmatprep.subr.mxu0 0.0
    %576 = vmatpush1.msra.mxu0 0.0
    %577 = vmatprep.subr.mxu0 0.0
    %578 = vmatpush1.msra.mxu0 0.0
    %579 = vmatprep.subr.mxu0 0.0
    %580 = vmatpush1.msra.mxu0 0.0
    %581 = vmatprep.subr.mxu0 0.0
    %582 = vmatpush1.msra.mxu0 0.0
    %583 = vmatprep.subr.mxu0 0.0
    %584 = vmatpush1.msra.mxu0 0.0
    %585 = vmatprep.mubr.f32.mxu0 0.0
    %586 = vmatmul.mubr.f32.gmra.mrb[0].mxu0 %v519
    %v587 = vpop.f32.mrb[0].mxu0
    %v588 = vadd.f32 %v514, %v587
    %v589 = vpop.f32.mrb[0].mxu0
    %590 = vdwg.mxu0
    %v591 = vld [vmem:[%s12] sm:$0x1]
    %v593 = vlaneseq
    %v594 = vshrl.u32 %v593, 7
    %v595 = vsub.s32 0, %v594
    %v596 = vrot.slane %v591, %v595
    %v598 = vadd.f32 %v588, %v596
    %v599 = vmax.f32 %v598, 0.0
    %v600 = vld [vmem:[%s13] sm:$0xff]
    %v601 = vld [vmem:[%s13 + $0x8] sm:$0xff]
    %v602 = vld [vmem:[%s13 + $0x10] sm:$0xff]
    %v603 = vld [vmem:[%s13 + $0x18] sm:$0xff]
    %v604 = vld [vmem:[%s13 + $0x20] sm:$0xff]
    %v605 = vld [vmem:[%s13 + $0x28] sm:$0xff]
    %v606 = vld [vmem:[%s13 + $0x30] sm:$0xff]
    %v607 = vld [vmem:[%s13 + $0x38] sm:$0xff]
    %v608 = vld [vmem:[%s14] sm:$0x1]
    %v610 = vlaneseq
    %v611 = vshrl.u32 %v610, 7
    %v612 = vsub.s32 0, %v611
    %v613 = vrot.slane %v608, %v612
    %v616 = vsel %vm269, %v599, 0
    %618 = vmatprep.subr.mxu0 0.0
    %619 = vmatpush1.msra.mxu0 %v600
    %620 = vmatprep.subr.mxu0 0.0
    %621 = vmatpush1.msra.mxu0 %v601
    %622 = vmatprep.subr.mxu0 0.0
    %623 = vmatpush1.msra.mxu0 %v602
    %624 = vmatprep.subr.mxu0 0.0
    %625 = vmatpush1.msra.mxu0 %v603
    %626 = vmatprep.subr.mxu0 0.0
    %627 = vmatpush1.msra.mxu0 %v604
    %628 = vmatprep.subr.mxu0 0.0
    %629 = vmatpush1.msra.mxu0 %v605
    %630 = vmatprep.subr.mxu0 0.0
    %631 = vmatpush1.msra.mxu0 %v606
    %632 = vmatprep.subr.mxu0 0.0
    %633 = vmatpush1.msra.mxu0 %v607
    %634 = vmatprep.subr.mxu0 0.0
    %635 = vmatpush1.msra.mxu0 0.0
    %636 = vmatprep.subr.mxu0 0.0
    %637 = vmatpush1.msra.mxu0 0.0
    %638 = vmatprep.subr.mxu0 0.0
    %639 = vmatpush1.msra.mxu0 0.0
    %640 = vmatprep.subr.mxu0 0.0
    %641 = vmatpush1.msra.mxu0 0.0
    %642 = vmatprep.subr.mxu0 0.0
    %643 = vmatpush1.msra.mxu0 0.0
    %644 = vmatprep.subr.mxu0 0.0
    %645 = vmatpush1.msra.mxu0 0.0
    %646 = vmatprep.subr.mxu0 0.0
    %647 = vmatpush1.msra.mxu0 0.0
    %648 = vmatprep.subr.mxu0 0.0
    %649 = vmatpush1.msra.mxu0 0.0
    %650 = vmatprep.subr.mxu0 0.0
    %651 = vmatpush1.msra.mxu0 0.0
    %652 = vmatprep.subr.mxu0 0.0
    %653 = vmatpush1.msra.mxu0 0.0
    %654 = vmatprep.subr.mxu0 0.0
    %655 = vmatpush1.msra.mxu0 0.0
    %656 = vmatprep.subr.mxu0 0.0
    %657 = vmatpush1.msra.mxu0 0.0
    %658 = vmatprep.subr.mxu0 0.0
    %659 = vmatpush1.msra.mxu0 0.0
    %660 = vmatprep.subr.mxu0 0.0
    %661 = vmatpush1.msra.mxu0 0.0
    %662 = vmatprep.subr.mxu0 0.0
    %663 = vmatpush1.msra.mxu0 0.0
    %664 = vmatprep.subr.mxu0 0.0
    %665 = vmatpush1.msra.mxu0 0.0
    %666 = vmatprep.subr.mxu0 0.0
    %667 = vmatpush1.msra.mxu0 0.0
    %668 = vmatprep.subr.mxu0 0.0
    %669 = vmatpush1.msra.mxu0 0.0
    %670 = vmatprep.subr.mxu0 0.0
    %671 = vmatpush1.msra.mxu0 0.0
    %672 = vmatprep.subr.mxu0 0.0
    %673 = vmatpush1.msra.mxu0 0.0
    %674 = vmatprep.subr.mxu0 0.0
    %675 = vmatpush1.msra.mxu0 0.0
    %676 = vmatprep.subr.mxu0 0.0
    %677 = vmatpush1.msra.mxu0 0.0
    %678 = vmatprep.subr.mxu0 0.0
    %679 = vmatpush1.msra.mxu0 0.0
    %680 = vmatprep.subr.mxu0 0.0
    %681 = vmatpush1.msra.mxu0 0.0
    %682 = vmatprep.mubr.f32.mxu0 0.0
    %683 = vmatmul.mubr.f32.gmra.mrb[0].mxu0 %v616
    %v684 = vpop.f32.mrb[0].mxu0
    %v685 = vadd.f32 %v613, %v684
    %v686 = vpop.f32.mrb[0].mxu0
    %687 = vdwg.mxu0
    %v688 = vmax.f32 %v685, 0.0
    %v689 = vld [vmem:[%s15] sm:$0xff]
    %v690 = vld [vmem:[%s15 + $0x8] sm:$0xff]
    %v691 = vld [vmem:[%s15 + $0x10] sm:$0xff]
    %v692 = vld [vmem:[%s15 + $0x18] sm:$0xff]
    %v693 = vld [vmem:[%s15 + $0x20] sm:$0xff]
    %v694 = vld [vmem:[%s15 + $0x28] sm:$0xff]
    %v695 = vld [vmem:[%s15 + $0x30] sm:$0xff]
    %v696 = vld [vmem:[%s15 + $0x38] sm:$0xff]
    %v697 = vld [vmem:[%s16] sm:$0x1]
    %v699 = vlaneseq
    %v700 = vshrl.u32 %v699, 7
    %v701 = vsub.s32 0, %v700
    %v702 = vrot.slane %v697, %v701
    %v705 = vsel %vm269, %v688, 0
    %707 = vmatprep.subr.mxu0 0.0
    %708 = vmatpush1.msra.mxu0 %v689
    %709 = vmatprep.subr.mxu0 0.0
    %710 = vmatpush1.msra.mxu0 %v690
    %711 = vmatprep.subr.mxu0 0.0
    %712 = vmatpush1.msra.mxu0 %v691
    %713 = vmatprep.subr.mxu0 0.0
    %714 = vmatpush1.msra.mxu0 %v692
    %715 = vmatprep.subr.mxu0 0.0
    %716 = vmatpush1.msra.mxu0 %v693
    %717 = vmatprep.subr.mxu0 0.0
    %718 = vmatpush1.msra.mxu0 %v694
    %719 = vmatprep.subr.mxu0 0.0
    %720 = vmatpush1.msra.mxu0 %v695
    %721 = vmatprep.subr.mxu0 0.0
    %722 = vmatpush1.msra.mxu0 %v696
    %723 = vmatprep.subr.mxu0 0.0
    %724 = vmatpush1.msra.mxu0 0.0
    %725 = vmatprep.subr.mxu0 0.0
    %726 = vmatpush1.msra.mxu0 0.0
    %727 = vmatprep.subr.mxu0 0.0
    %728 = vmatpush1.msra.mxu0 0.0
    %729 = vmatprep.subr.mxu0 0.0
    %730 = vmatpush1.msra.mxu0 0.0
    %731 = vmatprep.subr.mxu0 0.0
    %732 = vmatpush1.msra.mxu0 0.0
    %733 = vmatprep.subr.mxu0 0.0
    %734 = vmatpush1.msra.mxu0 0.0
    %735 = vmatprep.subr.mxu0 0.0
    %736 = vmatpush1.msra.mxu0 0.0
    %737 = vmatprep.subr.mxu0 0.0
    %738 = vmatpush1.msra.mxu0 0.0
    %739 = vmatprep.subr.mxu0 0.0
    %740 = vmatpush1.msra.mxu0 0.0
    %741 = vmatprep.subr.mxu0 0.0
    %742 = vmatpush1.msra.mxu0 0.0
    %743 = vmatprep.subr.mxu0 0.0
    %744 = vmatpush1.msra.mxu0 0.0
    %745 = vmatprep.subr.mxu0 0.0
    %746 = vmatpush1.msra.mxu0 0.0
    %747 = vmatprep.subr.mxu0 0.0
    %748 = vmatpush1.msra.mxu0 0.0
    %749 = vmatprep.subr.mxu0 0.0
    %750 = vmatpush1.msra.mxu0 0.0
    %751 = vmatprep.subr.mxu0 0.0
    %752 = vmatpush1.msra.mxu0 0.0
    %753 = vmatprep.subr.mxu0 0.0
    %754 = vmatpush1.msra.mxu0 0.0
    %755 = vmatprep.subr.mxu0 0.0
    %756 = vmatpush1.msra.mxu0 0.0
    %757 = vmatprep.subr.mxu0 0.0
    %758 = vmatpush1.msra.mxu0 0.0
    %759 = vmatprep.subr.mxu0 0.0
    %760 = vmatpush1.msra.mxu0 0.0
    %761 = vmatprep.subr.mxu0 0.0
    %762 = vmatpush1.msra.mxu0 0.0
    %763 = vmatprep.subr.mxu0 0.0
    %764 = vmatpush1.msra.mxu0 0.0
    %765 = vmatprep.subr.mxu0 0.0
    %766 = vmatpush1.msra.mxu0 0.0
    %767 = vmatprep.subr.mxu0 0.0
    %768 = vmatpush1.msra.mxu0 0.0
    %769 = vmatprep.subr.mxu0 0.0
    %770 = vmatpush1.msra.mxu0 0.0
    %771 = vmatprep.mubr.f32.mxu0 0.0
    %772 = vmatmul.mubr.f32.gmra.mrb[0].mxu0 %v705
    %v773 = vpop.f32.mrb[0].mxu0
    %v774 = vadd.f32 %v702, %v773
    %v775 = vpop.f32.mrb[0].mxu0
    %776 = vdwg.mxu0
    %v777 = vsub.f32 0.0, %v774
    %v778 = vmul.f32 %v777, 1.442695
    %v779 = vpow.pop %v778
    %v780 = vadd.f32 %v779, 1.0
    %v781 = vrcp.pop %v780
    %v782 = vmul.f32 1.0, %v781
    %783 = vst.msk [vmem:[#allocation7] sm:$0xff] %vm171, %v782
    %784 = vst.msk [vmem:[#allocation8] sm:$0xff] %vm517, %v429
    %786 = vrot.lane.b32.xlu0 %v429, 112
    %v787 = vpop.permute.xlu0 %786
    %789 = vst.msk [vmem:[#allocation10] sm:$0xff] %vm517, %v787
    // Predicated region
    $region78: #{m2_forward.1} parent=1 // pred_check
      _
    $region79: #{m2_forward.1} parent=1 // pred_check_branch
      %791 = sbr.rel (0) target = $region81
    $region80: #{m2_forward.1} parent=1 // pred_region
      %s793 = ssub.s32 128, 128
      %794 = vsyncadd [#allocation4], %s793
      %s796 = sshll.u32 [#allocation7], 4
      %s797 = int_to_ptr.vmem [resolvable:$true] %s796
      %799 = dma.vmem_to_hbm [thread:$0]  %s797, 128, %s17, [#allocation4]
    $region81: #{m2_forward.1} parent=1 // pred_fallthru
      _
    // Predicated region
    $region82: #{m2_forward.1} parent=1 // pred_check
      _
    $region83: #{m2_forward.1} parent=1 // pred_check_branch
      %801 = sbr.rel (0) target = $region85
    $region84: #{m2_forward.1} parent=1 // pred_region
      %s803 = ssub.s32 128, 128
      %804 = vsyncadd [#allocation9], %s803
      %s806 = sshll.u32 [#allocation8], 4
      %s807 = int_to_ptr.vmem [resolvable:$true] %s806
      %809 = dma.vmem_to_hbm [thread:$0]  %s807, 128, %s18, [#allocation9]
    $region85: #{m2_forward.1} parent=1 // pred_fallthru
      _
    // Predicated region
    $region86: #{m2_forward.1} parent=1 // pred_check
      _
    $region87: #{m2_forward.1} parent=1 // pred_check_branch
      %811 = sbr.rel (0) target = $region89
    $region88: #{m2_forward.1} parent=1 // pred_region
      %s813 = ssub.s32 128, 128
      %814 = vsyncadd [#allocation9], %s813
      %s816 = sshll.u32 [#allocation10], 4
      %s817 = int_to_ptr.vmem [resolvable:$true] %s816
      %819 = dma.vmem_to_hbm [thread:$0]  %s817, 128, %s19, [#allocation9]
    $region89: #{m2_forward.1} parent=1 // pred_fallthru
      _
    // Predicated region
    $region90: #{m2_forward.1} parent=1 // pred_check
      _
    $region91: #{m2_forward.1} parent=1 // pred_check_branch
      %821 = sbr.rel (0) target = $region93
    $region92: #{m2_forward.1} parent=1 // pred_region
      %822 = dma.done [#allocation4], 128
    $region93: #{m2_forward.1} parent=1 // pred_fallthru
      _
    // Predicated region
    $region94: #{m2_forward.1} parent=1 // pred_check
      _
    $region95: #{m2_forward.1} parent=1 // pred_check_branch
      %824 = sbr.rel (0) target = $region97
    $region96: #{m2_forward.1} parent=1 // pred_region
      %825 = dma.done [#allocation9], 128
    $region97: #{m2_forward.1} parent=1 // pred_fallthru
      _
    // Predicated region
    $region98: #{m2_forward.1} parent=1 // pred_check
      _
    $region99: #{m2_forward.1} parent=1 // pred_check_branch
      %827 = sbr.rel (0) target = $region101
    $region100: #{m2_forward.1} parent=1 // pred_region
      %828 = dma.done [#allocation9], 128
    $region101: #{m2_forward.1} parent=1 // pred_fallthru
      _
    %829 = vsyncpa [#allocation3], 1
    %830 = vsyncpa [#allocation6], 1
    %831 = vsyncpa [#allocation4], 1
    %832 = vsyncpa [#allocation9], 1

</llo_original>
